<compile_context>
chip_gen: v5e
topology: v5e:2x2
jax: 0.10.0
libtpu: 0.0.40
codegen_flags: <defaults>
</compile_context>

<pallas_src>
import functools

import jax
import jax.numpy as jnp
from jax.experimental import pallas as pl
from jax.experimental.pallas import tpu as pltpu


def _round_up(n: int, m: int) -> int:
    return ((n + m - 1) // m) * m


def _cdiv(a: int, b: int) -> int:
    return -(-a // b)


def _resolve_bf16(use_bf16):
    """Auto-enable the bf16 EUP/MXU path on v6e/v7x; keep f32 elsewhere."""
    if use_bf16 is not None:
        return bool(use_bf16)
    try:
        kind = jax.devices()[0].device_kind.lower()
    except Exception:  # pragma: no cover - e.g. no devices during tracing
        return False
    return ('v6' in kind) or ('v7' in kind)


def _choose_tiling(n: int, tile_n: int):
    """Pad N only to a 128 multiple; adaptively shrink tile so waste is small.

    Also keeps num_tiles >= 2 (when there is enough work) so the grid splits
    across v7x's two TensorCores under dimension_semantics=("parallel",).
    """
    n_pad128 = _round_up(max(n, 1), 128)
    num_tiles = max(1, _cdiv(n_pad128, max(tile_n, 128)))
    if num_tiles == 1 and n_pad128 >= 256:
        num_tiles = 2
    tile = _round_up(_cdiv(n_pad128, num_tiles), 128)
    n_pad = num_tiles * tile
    return tile, num_tiles, n_pad


# ----------------------------------------------------------------------------
# Pallas kernel (transposed layout: arrays are (features, batch_tile))
# ----------------------------------------------------------------------------
def _pinn_kernel(xt_ref,                      # (d_in, T)
                 w1t_ref, b1t_ref,            # (H, d_in) f32, (H, 1) f32
                 w2t_ref, b2t_ref,            # (H, H),   (H, 1) f32
                 w3t_ref, b3t_ref,            # (d_out,H),(d_out,1) f32
                 ut_ref,                      # (d_out, T)
                 *, bc: str, use_bf16: bool):
    x0 = xt_ref[0:1, :].astype(jnp.float32)   # (1, T)  lane-dense row
    x1 = xt_ref[1:2, :].astype(jnp.float32)   # (1, T)

    # ---- Layer 1 (K=2): VPU outer-product (f32), skip the MXU entirely -----
    w1t = w1t_ref[...]                                        # (H, 2) f32
    h = w1t[:, 0:1] * x0 + w1t[:, 1:2] * x1 + b1t_ref[...]    # (H, T) f32
    if use_bf16:
        h = jnp.tanh(h.astype(jnp.bfloat16))   # bf16 EUP; stays bf16 into MXU
    else:
        h = jnp.tanh(h)

    # ---- Layers 2/3 on the MXU; weights resident in VMEM -------------------
    h = jnp.dot(w2t_ref[...], h, preferred_element_type=jnp.float32) + b2t_ref[...]
    if use_bf16:
        h = jnp.tanh(h.astype(jnp.bfloat16))
    else:
        h = jnp.tanh(h)
    out = jnp.dot(w3t_ref[...], h, preferred_element_type=jnp.float32) + b3t_ref[...]
    # out: (d_out, T) f32

    # ---- Dirichlet trial-function multiplier (f32) --------------------------
    if bc == 'ls':
        u = out * (x0 + 0.5)
    elif bc == 'rs':
        u = out * (x0 - 0.5)
    elif bc == 'ls-rs':
        u = out * ((x0 + 0.5) * (x0 - 0.5))
    elif bc == 'fc':
        u = out * ((x0 * x0 - 0.25) * (x1 * x1 - 0.25))
    elif bc == 'fc_circular':
        u = out * ((1.0 - x0 * x0 - x1 * x1) * 0.5)
    elif bc == 'scordelis_lo':
        # Per-output-row multipliers:
        #   row 0   : x0^2 + x1^2
        #   row 1,2 : (x0 + 0.5) * (x0 - 0.5)
        #   row 3,4 : 1
        d_out, t = out.shape
        row = jax.lax.broadcasted_iota(jnp.int32, (d_out, t), 0)
        m0 = x0 * x0 + x1 * x1
        m12 = (x0 + 0.5) * (x0 - 0.5)
        mult = jnp.where(row == 0, m0,
                         jnp.where((row == 1) | (row == 2), m12,
                                   jnp.float32(1.0)))
        u = out * mult
    else:
        raise ValueError('Missing Dirichlet boundary conditions.')

    ut_ref[...] = u.astype(ut_ref.dtype)      # lane-dense store (d_out, T)


# ----------------------------------------------------------------------------
# Core feature-major implementation:  xt:(d_in, N) -> ut:(d_out, N)
# (no wrapper-side transposes; padding only to a multiple of 128)
# ----------------------------------------------------------------------------
@functools.partial(jax.jit, static_argnames=('bc', 'tile_n', 'use_bf16'))
def _pinn_forward_t_impl(xt, params, bc, tile_n, use_bf16):
    d_in, n = xt.shape
    d_out = params['w3'].shape[1]

    tile, num_tiles, n_pad = _choose_tiling(n, tile_n)

    xt = xt.astype(jnp.float32)
    if n_pad > n:
        xt = jnp.pad(xt, ((0, 0), (0, n_pad - n)))

    mxu_dtype = jnp.bfloat16 if use_bf16 else jnp.float32
    w1t = params['w1'].T.astype(jnp.float32)          # (H, d_in)  VPU path stays f32
    b1t = params['b1'].reshape(-1, 1).astype(jnp.float32)
    w2t = params['w2'].T.astype(mxu_dtype)            # (H, H)
    b2t = params['b2'].reshape(-1, 1).astype(jnp.float32)
    w3t = params['w3'].T.astype(mxu_dtype)            # (d_out, H)
    b3t = params['b3'].reshape(-1, 1).astype(jnp.float32)

    in_specs = [
        pl.BlockSpec((d_in, tile), lambda i: (0, i)),   # x tile (pipelined)
        pl.BlockSpec(w1t.shape, lambda i: (0, 0)),      # weights: resident in VMEM
        pl.BlockSpec(b1t.shape, lambda i: (0, 0)),
        pl.BlockSpec(w2t.shape, lambda i: (0, 0)),
        pl.BlockSpec(b2t.shape, lambda i: (0, 0)),
        pl.BlockSpec(w3t.shape, lambda i: (0, 0)),
        pl.BlockSpec(b3t.shape, lambda i: (0, 0)),
    ]
    out_spec = pl.BlockSpec((d_out, tile), lambda i: (0, i))

    cp_kwargs = dict(dimension_semantics=("parallel",))   # megacore split on v7x
    if tile >= 32768:
        # Very large tiles can exceed v5e's 16 MiB scoped-VMEM default.
        cp_kwargs['vmem_limit_bytes'] = 64 * 1024 * 1024

    ut = pl.pallas_call(
        functools.partial(_pinn_kernel, bc=bc, use_bf16=use_bf16),
        out_shape=jax.ShapeDtypeStruct((d_out, n_pad), jnp.float32),
        grid=(num_tiles,),
        in_specs=in_specs,
        out_specs=out_spec,
        compiler_params=pltpu.CompilerParams(**cp_kwargs),
    )(xt, w1t, b1t, w2t, b2t, w3t, b3t)

    if n_pad > n:
        ut = ut[:, :n]
    return ut


def pinn_forward_t(xt, params, bc, tile_n=8192, use_bf16=None):
    """Feature-major API: xt (d_in, N) -> u (d_out, N). No transposes."""
    return _pinn_forward_t_impl(xt, params, bc, tile_n, _resolve_bf16(use_bf16))


# ----------------------------------------------------------------------------
# Compatibility wrapper keeping the PyTorch contract x:(N,d_in) -> u:(N,d_out)
# (pays one transpose in / one out; prefer pinn_forward_t for large N)
# ----------------------------------------------------------------------------
def pinn_forward(x, params, bc, tile_n=8192, use_bf16=None):
    ut = _pinn_forward_t_impl(x.astype(jnp.float32).T, params, bc, tile_n,
                              _resolve_bf16(use_bf16))
    return ut.T


# ----------------------------------------------------------------------------
# Deterministic parameter init (PyTorch-style uniform(-1/sqrt(fan_in), +))
# ----------------------------------------------------------------------------
def init_params(key, input_dim, hidden, output_dim):
    ks = jax.random.split(key, 6)

    def linear(kw, kb, fan_in, fan_out):
        bound = 1.0 / jnp.sqrt(fan_in)
        w = jax.random.uniform(kw, (fan_in, fan_out), jnp.float32, -bound, bound)
        b = jax.random.uniform(kb, (1, fan_out), jnp.float32, -bound, bound)
        return w, b

    w1, b1 = linear(ks[0], ks[1], input_dim, hidden)
    w2, b2 = linear(ks[2], ks[3], hidden, hidden)
    w3, b3 = linear(ks[4], ks[5], hidden, output_dim)
    return dict(w1=w1, b1=b1, w2=w2, b2=b2, w3=w3, b3=b3)


# ----------------------------------------------------------------------------
# Pure-JAX reference (mirrors the PyTorch forward) for a correctness check
# ----------------------------------------------------------------------------
def pinn_ref(x, p, bc):
    h = jnp.tanh(x @ p['w1'] + p['b1'])
    h = jnp.tanh(h @ p['w2'] + p['b2'])
    out = h @ p['w3'] + p['b3']
    x0, x1 = x[:, 0], x[:, 1]
    if bc == 'ls':
        trial = x0 + 0.5
    elif bc == 'rs':
        trial = x0 - 0.5
    elif bc == 'ls-rs':
        trial = (x0 + 0.5) * (x0 - 0.5)
    elif bc == 'fc':
        trial = (x0 ** 2 - 0.25) * (x1 ** 2 - 0.25)
    elif bc == 'fc_circular':
        trial = (1.0 - x0 * x0 - x1 * x1) / 2.0
    elif bc == 'scordelis_lo':
        return jnp.stack([
            out[:, 0] * (x0 ** 2 + x1 ** 2),
            out[:, 1] * (x0 + 0.5) * (x0 - 0.5),
            out[:, 2] * (x0 + 0.5) * (x0 - 0.5),
            out[:, 3],
            out[:, 4],
        ], axis=1)
    else:
        raise ValueError('Missing Dirichlet boundary conditions.')
    return out * trial[:, None]


if __name__ == "__main__":
    # inputDim = 2 (x, y), arch = [32, 'tanh', 32, 'tanh'], outputDim = 5.
    N, INPUT_DIM, HIDDEN, OUTPUT_DIM = 8, 2, 32, 5

    key = jax.random.PRNGKey(0)
    k_x, k_p = jax.random.split(key)
    x = jax.random.uniform(k_x, (N, INPUT_DIM), jnp.float32, -0.5, 0.5)
    params = init_params(k_p, INPUT_DIM, HIDDEN, OUTPUT_DIM)

    bcs = ('ls', 'rs', 'ls-rs', 'fc', 'fc_circular', 'scordelis_lo')

    # 1) Exact f32 path: tight tolerance against the reference.
    for bc in bcs:
        u = jax.block_until_ready(pinn_forward(x, params, bc=bc, use_bf16=False))
        u_ref = pinn_ref(x, params, bc)
        assert u.shape == (N, OUTPUT_DIM), f"bad shape for bc={bc}: {u.shape}"
        assert jnp.allclose(u, u_ref, atol=2e-5, rtol=1e-4), f"f32 mismatch for bc={bc}"

    # 2) Auto-precision path (bf16 tanh/MXU on v6e/v7x): looser tolerance.
    for bc in bcs:
        u = jax.block_until_ready(pinn_forward(x, params, bc=bc))
        u_ref = pinn_ref(x, params, bc)
        assert jnp.allclose(u, u_ref, atol=1e-2, rtol=5e-2), f"auto mismatch for bc={bc}"

    # 3) Multi-tile + ragged-N path through the feature-major API (no transposes).
    N2 = 300
    x2 = jax.random.uniform(jax.random.PRNGKey(1), (N2, INPUT_DIM), jnp.float32, -0.5, 0.5)
    ut2 = jax.block_until_ready(
        pinn_forward_t(x2.T, params, bc='fc', tile_n=128, use_bf16=False))
    assert ut2.shape == (OUTPUT_DIM, N2), f"bad shape: {ut2.shape}"
    assert jnp.allclose(ut2.T, pinn_ref(x2, params, 'fc'), atol=2e-5, rtol=1e-4), \
        "multi-tile mismatch"

    print("KERNEL_OK")
</pallas_src>

<mosaic_0001>
module attributes {stable_mosaic.version = 11 : i64} {
  func.func @_pinn_kernel(%arg0: i32, %arg1: memref<2x128xf32, #tpu.memory_space<vmem>>, %arg2: memref<32x2xf32, #tpu.memory_space<vmem>>, %arg3: memref<32x1xf32, #tpu.memory_space<vmem>>, %arg4: memref<32x32xf32, #tpu.memory_space<vmem>>, %arg5: memref<32x1xf32, #tpu.memory_space<vmem>>, %arg6: memref<5x32xf32, #tpu.memory_space<vmem>>, %arg7: memref<5x1xf32, #tpu.memory_space<vmem>>, %arg8: memref<5x128xf32, #tpu.memory_space<vmem>>) attributes {dimension_semantics = [#tpu.dimension_semantics<parallel>], iteration_bounds = array<i64: 1>, scalar_prefetch = 0 : i64, scratch_operands = 0 : i64, tpu.core_type = #tpu.core_type<tc>, window_params = [{transform_indices = @transform_0, window_bounds = array<i64: 2, 128>}, {pipeline_mode = #tpu.pipeline_mode<synchronous>, transform_indices = @transform_1, window_bounds = array<i64: 32, 2>}, {pipeline_mode = #tpu.pipeline_mode<synchronous>, transform_indices = @transform_2, window_bounds = array<i64: 32, 1>}, {pipeline_mode = #tpu.pipeline_mode<synchronous>, transform_indices = @transform_3, window_bounds = array<i64: 32, 32>}, {pipeline_mode = #tpu.pipeline_mode<synchronous>, transform_indices = @transform_4, window_bounds = array<i64: 32, 1>}, {pipeline_mode = #tpu.pipeline_mode<synchronous>, transform_indices = @transform_5, window_bounds = array<i64: 5, 32>}, {pipeline_mode = #tpu.pipeline_mode<synchronous>, transform_indices = @transform_6, window_bounds = array<i64: 5, 1>}, {transform_indices = @transform_7, window_bounds = array<i64: 5, 128>}]} {
    %c0 = arith.constant 0 : index
    %c0_0 = arith.constant 0 : index
    %0 = vector.load %arg1[%c0, %c0_0] : memref<2x128xf32, #tpu.memory_space<vmem>>, vector<1x128xf32>
    %c1 = arith.constant 1 : index
    %c0_1 = arith.constant 0 : index
    %1 = vector.load %arg1[%c1, %c0_1] : memref<2x128xf32, #tpu.memory_space<vmem>>, vector<1x128xf32>
    %c0_2 = arith.constant 0 : index
    %c0_3 = arith.constant 0 : index
    %2 = vector.load %arg2[%c0_2, %c0_3] : memref<32x2xf32, #tpu.memory_space<vmem>>, vector<32x2xf32>
    %3 = vector.extract_strided_slice %2 {offsets = [0, 0], sizes = [32, 1], strides = [1, 1]} : vector<32x2xf32> to vector<32x1xf32>
    %4 = vector.broadcast %3 : vector<32x1xf32> to vector<32x128xf32>
    %5 = vector.broadcast %0 : vector<1x128xf32> to vector<32x128xf32>
    %6 = arith.mulf %4, %5 : vector<32x128xf32>
    %7 = vector.extract_strided_slice %2 {offsets = [0, 1], sizes = [32, 1], strides = [1, 1]} : vector<32x2xf32> to vector<32x1xf32>
    %8 = vector.broadcast %7 : vector<32x1xf32> to vector<32x128xf32>
    %9 = vector.broadcast %1 : vector<1x128xf32> to vector<32x128xf32>
    %10 = arith.mulf %8, %9 : vector<32x128xf32>
    %11 = arith.addf %6, %10 : vector<32x128xf32>
    %c0_4 = arith.constant 0 : index
    %c0_5 = arith.constant 0 : index
    %12 = vector.load %arg3[%c0_4, %c0_5] : memref<32x1xf32, #tpu.memory_space<vmem>>, vector<32x1xf32>
    %13 = vector.broadcast %12 : vector<32x1xf32> to vector<32x128xf32>
    %14 = arith.addf %11, %13 : vector<32x128xf32>
    %15 = math.tanh %14 : vector<32x128xf32>
    %c0_6 = arith.constant 0 : index
    %c0_7 = arith.constant 0 : index
    %16 = vector.load %arg4[%c0_6, %c0_7] : memref<32x32xf32, #tpu.memory_space<vmem>>, vector<32x32xf32>
    %cst = arith.constant dense<0.000000e+00> : vector<32x128xf32>
    %17 = tpu.matmul %16, %15, %cst {dimension_numbers = #tpu.dot_dimension_numbers<[1], [0], [0], [1], [0, 0, 1, 1], [], []>} : vector<32x32xf32>, vector<32x128xf32>, vector<32x128xf32> -> vector<32x128xf32>
    %c0_8 = arith.constant 0 : index
    %c0_9 = arith.constant 0 : index
    %18 = vector.load %arg5[%c0_8, %c0_9] : memref<32x1xf32, #tpu.memory_space<vmem>>, vector<32x1xf32>
    %19 = vector.broadcast %18 : vector<32x1xf32> to vector<32x128xf32>
    %20 = arith.addf %17, %19 : vector<32x128xf32>
    %21 = math.tanh %20 : vector<32x128xf32>
    %c0_10 = arith.constant 0 : index
    %c0_11 = arith.constant 0 : index
    %22 = vector.load %arg6[%c0_10, %c0_11] : memref<5x32xf32, #tpu.memory_space<vmem>>, vector<5x32xf32>
    %cst_12 = arith.constant dense<0.000000e+00> : vector<5x128xf32>
    %23 = tpu.matmul %22, %21, %cst_12 {dimension_numbers = #tpu.dot_dimension_numbers<[1], [0], [0], [1], [0, 0, 1, 1], [], []>} : vector<5x32xf32>, vector<32x128xf32>, vector<5x128xf32> -> vector<5x128xf32>
    %c0_13 = arith.constant 0 : index
    %c0_14 = arith.constant 0 : index
    %24 = vector.load %arg7[%c0_13, %c0_14] : memref<5x1xf32, #tpu.memory_space<vmem>>, vector<5x1xf32>
    %25 = vector.broadcast %24 : vector<5x1xf32> to vector<5x128xf32>
    %26 = arith.addf %23, %25 : vector<5x128xf32>
    %cst_15 = arith.constant 5.000000e-01 : f32
    %27 = vector.broadcast %cst_15 : f32 to vector<1x128xf32>
    %28 = arith.addf %0, %27 : vector<1x128xf32>
    %29 = vector.broadcast %28 : vector<1x128xf32> to vector<5x128xf32>
    %30 = arith.mulf %26, %29 : vector<5x128xf32>
    %c0_16 = arith.constant 0 : index
    %c0_17 = arith.constant 0 : index
    %31 = vector.load %arg8[%c0_16, %c0_17] : memref<5x128xf32, #tpu.memory_space<vmem>>, vector<5x128xf32>
    tpu.vector_store %arg8[%c0_16, %c0_17], %30 {strides = array<i32>} : memref<5x128xf32, #tpu.memory_space<vmem>>, vector<5x128xf32>,
    return
  }
  func.func @transform_0(%arg0: i32) -> (i32, i32) {
    %c0_i32 = arith.constant 0 : i32
    %c0_i32_0 = arith.constant 0 : i32
    return %c0_i32, %arg0 : i32, i32
  }
  func.func @transform_1(%arg0: i32) -> (i32, i32) {
    %c0_i32 = arith.constant 0 : i32
    %c0_i32_0 = arith.constant 0 : i32
    %c0_i32_1 = arith.constant 0 : i32
    return %c0_i32, %c0_i32_0 : i32, i32
  }
  func.func @transform_2(%arg0: i32) -> (i32, i32) {
    %c0_i32 = arith.constant 0 : i32
    %c0_i32_0 = arith.constant 0 : i32
    %c0_i32_1 = arith.constant 0 : i32
    return %c0_i32, %c0_i32_0 : i32, i32
  }
  func.func @transform_3(%arg0: i32) -> (i32, i32) {
    %c0_i32 = arith.constant 0 : i32
    %c0_i32_0 = arith.constant 0 : i32
    %c0_i32_1 = arith.constant 0 : i32
    return %c0_i32, %c0_i32_0 : i32, i32
  }
  func.func @transform_4(%arg0: i32) -> (i32, i32) {
    %c0_i32 = arith.constant 0 : i32
    %c0_i32_0 = arith.constant 0 : i32
    %c0_i32_1 = arith.constant 0 : i32
    return %c0_i32, %c0_i32_0 : i32, i32
  }
  func.func @transform_5(%arg0: i32) -> (i32, i32) {
    %c0_i32 = arith.constant 0 : i32
    %c0_i32_0 = arith.constant 0 : i32
    %c0_i32_1 = arith.constant 0 : i32
    return %c0_i32, %c0_i32_0 : i32, i32
  }
  func.func @transform_6(%arg0: i32) -> (i32, i32) {
    %c0_i32 = arith.constant 0 : i32
    %c0_i32_0 = arith.constant 0 : i32
    %c0_i32_1 = arith.constant 0 : i32
    return %c0_i32, %c0_i32_0 : i32, i32
  }
  func.func @transform_7(%arg0: i32) -> (i32, i32) {
    %c0_i32 = arith.constant 0 : i32
    %c0_i32_0 = arith.constant 0 : i32
    return %c0_i32, %arg0 : i32, i32
  }
}

</mosaic_0001>

<llo_original>
// kernel: _pinn_forward_t_impl.1
$region0: #{_pinn_forward_t_impl.1}
  #allocation0 [shape = 'u32[]', space=smem, size = 0x4, offset = 0x4, fixed_abs, tag = 'smem constant byte address 0x4 - core index']
  #allocation1 [shape = 'u32[72,128]{1,0:T(1,128)}', space=vmem, size = 0x9000, scoped, tag = 'internal scratch']
  %s0 = inlined_call_operand.vmem [shape: f32[2,128], index: 0, kind: input, shape index: {}]
  %s1 = inlined_call_operand.vmem [shape: f32[32,2], index: 1, kind: input, shape index: {}]
  %s2 = inlined_call_operand.vmem [shape: f32[32,1], index: 2, kind: input, shape index: {}]
  %s3 = inlined_call_operand.vmem [shape: f32[32,32], index: 3, kind: input, shape index: {}]
  %s4 = inlined_call_operand.vmem [shape: f32[32,1], index: 4, kind: input, shape index: {}]
  %s5 = inlined_call_operand.vmem [shape: f32[5,32], index: 5, kind: input, shape index: {}]
  %s6 = inlined_call_operand.vmem [shape: f32[5,1], index: 6, kind: input, shape index: {}]
  %s7 = inlined_call_operand.hbm [shape: f32[5,128], index: 7, kind: output, shape index: {}]
  %s8 = sld [smem:[#allocation0]]
  $region38: #{_pinn_forward_t_impl.1} parent=0
    _
  %s10 = ssub.s32 1, %s8
  %s11 = scalar_select 0, %s10, %s8
  $region1: #{_pinn_forward_t_impl.1} parent=0
    #allocation2 [shape = 'u8[4096]{0}', space=vmem, size = 0x1000, scoped, tag = 'output window, operand 0, single buffered']
    #allocation3 [shape = 's32[1]{0}', space=sflag, size = 0x4, scoped, tag = 'scoped memory for _pinn_forward_t_impl.1']
    %12 = vsyncpa [#allocation3], 0
    // Predicated region
    $region2: #{_pinn_forward_t_impl.1} parent=1 // pred_check
      _
    $region3: #{_pinn_forward_t_impl.1} parent=1 // pred_check_branch
      %14 = sbr.rel (0) target = $region5
    $region4: #{_pinn_forward_t_impl.1} parent=1 // pred_region
      _
    $region5: #{_pinn_forward_t_impl.1} parent=1 // pred_fallthru
      _
    // Predicated region
    $region6: #{_pinn_forward_t_impl.1} parent=1 // pred_check
      _
    $region7: #{_pinn_forward_t_impl.1} parent=1 // pred_check_branch
      %16 = sbr.rel (0) target = $region9
    $region8: #{_pinn_forward_t_impl.1} parent=1 // pred_region
      _
    $region9: #{_pinn_forward_t_impl.1} parent=1 // pred_fallthru
      _
    // Predicated region
    $region10: #{_pinn_forward_t_impl.1} parent=1 // pred_check
      _
    $region11: #{_pinn_forward_t_impl.1} parent=1 // pred_check_branch
      %18 = sbr.rel (0) target = $region13
    $region12: #{_pinn_forward_t_impl.1} parent=1 // pred_region
      _
    $region13: #{_pinn_forward_t_impl.1} parent=1 // pred_fallthru
      _
    // Predicated region
    $region14: #{_pinn_forward_t_impl.1} parent=1 // pred_check
      _
    $region15: #{_pinn_forward_t_impl.1} parent=1 // pred_check_branch
      %20 = sbr.rel (0) target = $region17
    $region16: #{_pinn_forward_t_impl.1} parent=1 // pred_region
      _
    $region17: #{_pinn_forward_t_impl.1} parent=1 // pred_fallthru
      _
    // Predicated region
    $region18: #{_pinn_forward_t_impl.1} parent=1 // pred_check
      _
    $region19: #{_pinn_forward_t_impl.1} parent=1 // pred_check_branch
      %22 = sbr.rel (0) target = $region21
    $region20: #{_pinn_forward_t_impl.1} parent=1 // pred_region
      _
    $region21: #{_pinn_forward_t_impl.1} parent=1 // pred_fallthru
      _
    // Predicated region
    $region22: #{_pinn_forward_t_impl.1} parent=1 // pred_check
      _
    $region23: #{_pinn_forward_t_impl.1} parent=1 // pred_check_branch
      %24 = sbr.rel (0) target = $region25
    $region24: #{_pinn_forward_t_impl.1} parent=1 // pred_region
      _
    $region25: #{_pinn_forward_t_impl.1} parent=1 // pred_fallthru
      _
    // Predicated region
    $region26: #{_pinn_forward_t_impl.1} parent=1 // pred_check
      _
    $region27: #{_pinn_forward_t_impl.1} parent=1 // pred_check_branch
      %26 = sbr.rel (0) target = $region29
    $region28: #{_pinn_forward_t_impl.1} parent=1 // pred_region
      _
    $region29: #{_pinn_forward_t_impl.1} parent=1 // pred_fallthru
      _
    %v27 = vld [vmem:[%s0] sm:$0x1]
    %v28 = vld [vmem:[%s0 + $0x1] sm:$0x1]
    %v29 = vld [vmem:[%s1] sm:$0xff]
    %v30 = vld [vmem:[%s1 + $0x8] sm:$0xff]
    %v31 = vld [vmem:[%s1 + $0x10] sm:$0xff]
    %v32 = vld [vmem:[%s1 + $0x18] sm:$0xff]
    %34 = vset.pattern.permute.xlu0 0
    %35 = vperm.xlu0 %34, %v29
    %v36 = vpop.permute.xlu0 %35
    %39 = vset.pattern.permute.xlu0 0
    %40 = vperm.xlu0 %39, %v30
    %v41 = vpop.permute.xlu0 %40
    %44 = vset.pattern.permute.xlu0 0
    %45 = vperm.xlu0 %44, %v31
    %v46 = vpop.permute.xlu0 %45
    %49 = vset.pattern.permute.xlu0 0
    %50 = vperm.xlu0 %49, %v32
    %v51 = vpop.permute.xlu0 %50
    %v53 = vperm.slane %v27, 0
    %v54 = vmul.f32 %v36, %v53
    %v55 = vmul.f32 %v41, %v53
    %v56 = vmul.f32 %v46, %v53
    %v57 = vmul.f32 %v51, %v53
    %58 = vset.pattern.permute.xlu0 1
    %59 = vperm.xlu0 %58, %v29
    %v60 = vpop.permute.xlu0 %59
    %62 = vset.pattern.permute.xlu0 1
    %63 = vperm.xlu0 %62, %v30
    %v64 = vpop.permute.xlu0 %63
    %66 = vset.pattern.permute.xlu0 1
    %67 = vperm.xlu0 %66, %v31
    %v68 = vpop.permute.xlu0 %67
    %70 = vset.pattern.permute.xlu0 1
    %71 = vperm.xlu0 %70, %v32
    %v72 = vpop.permute.xlu0 %71
    %v74 = vperm.slane %v28, 0
    %v75 = vmul.f32 %v60, %v74
    %v76 = vmul.f32 %v64, %v74
    %v77 = vmul.f32 %v68, %v74
    %v78 = vmul.f32 %v72, %v74
    %v79 = vadd.f32 %v54, %v75
    %v80 = vadd.f32 %v55, %v76
    %v81 = vadd.f32 %v56, %v77
    %v82 = vadd.f32 %v57, %v78
    %v83 = vld [vmem:[%s2] sm:$0xff]
    %v84 = vld [vmem:[%s2 + $0x8] sm:$0xff]
    %v85 = vld [vmem:[%s2 + $0x10] sm:$0xff]
    %v86 = vld [vmem:[%s2 + $0x18] sm:$0xff]
    %88 = vset.pattern.permute.xlu0 0
    %89 = vperm.xlu0 %88, %v83
    %v90 = vpop.permute.xlu0 %89
    %93 = vset.pattern.permute.xlu0 0
    %94 = vperm.xlu0 %93, %v84
    %v95 = vpop.permute.xlu0 %94
    %98 = vset.pattern.permute.xlu0 0
    %99 = vperm.xlu0 %98, %v85
    %v100 = vpop.permute.xlu0 %99
    %103 = vset.pattern.permute.xlu0 0
    %104 = vperm.xlu0 %103, %v86
    %v105 = vpop.permute.xlu0 %104
    %v107 = vadd.f32 %v79, %v90
    %v108 = vadd.f32 %v80, %v95
    %v109 = vadd.f32 %v81, %v100
    %v110 = vadd.f32 %v82, %v105
    %v111 = vtanh.pop %v107
    %v112 = vtanh.pop %v108
    %v113 = vtanh.pop %v109
    %v114 = vtanh.pop %v110
    %v115 = vld [vmem:[%s3] sm:$0xff]
    %v116 = vld [vmem:[%s3 + $0x8] sm:$0xff]
    %v117 = vld [vmem:[%s3 + $0x10] sm:$0xff]
    %v118 = vld [vmem:[%s3 + $0x18] sm:$0xff]
    %v119 = vld [vmem:[%s4] sm:$0xff]
    %v120 = vld [vmem:[%s4 + $0x8] sm:$0xff]
    %v121 = vld [vmem:[%s4 + $0x10] sm:$0xff]
    %v122 = vld [vmem:[%s4 + $0x18] sm:$0xff]
    %124 = vset.pattern.permute.xlu0 0
    %125 = vperm.xlu0 %124, %v119
    %v126 = vpop.permute.xlu0 %125
    %129 = vset.pattern.permute.xlu0 0
    %130 = vperm.xlu0 %129, %v120
    %v131 = vpop.permute.xlu0 %130
    %134 = vset.pattern.permute.xlu0 0
    %135 = vperm.xlu0 %134, %v121
    %v136 = vpop.permute.xlu0 %135
    %139 = vset.pattern.permute.xlu0 0
    %140 = vperm.xlu0 %139, %v122
    %v141 = vpop.permute.xlu0 %140
    %vm143 = vcmask 261120
    %v145 = vsel %vm143, %v115, 0
    %v148 = vsel %vm143, %v116, 0
    %v151 = vsel %vm143, %v117, 0
    %v154 = vsel %vm143, %v118, 0
    %156 = vmatpush.msra.mxu0 0.0
    %157 = vmatpush.msra.mxu0 0.0
    %158 = vmatpush.msra.mxu0 0.0
    %159 = vmatpush.msra.mxu0 0.0
    %160 = vmatpush.msra.mxu0 0.0
    %161 = vmatpush.msra.mxu0 0.0
    %162 = vmatpush.msra.mxu0 0.0
    %163 = vmatpush.msra.mxu0 0.0
    %164 = vmatpush.msra.mxu0 0.0
    %165 = vmatpush.msra.mxu0 0.0
    %166 = vmatpush.msra.mxu0 0.0
    %167 = vmatpush.msra.mxu0 0.0
    %168 = vmatpush.msra.mxu0 %v114
    %169 = vmatpush.msra.mxu0 %v113
    %170 = vmatpush.msra.mxu0 %v112
    %171 = vmatpush.msra.mxu0 %v111
    %172 = vmatmul.f32.gmra.mxu0 %v145
    %v173 = vpop.f32.mrf.mxu0
    %v174 = vadd.f32 %v126, %v173
    %175 = vmatmul.f32.gmra.mxu0 %v148
    %v176 = vpop.f32.mrf.mxu0
    %v177 = vadd.f32 %v131, %v176
    %178 = vmatmul.f32.gmra.mxu0 %v151
    %v179 = vpop.f32.mrf.mxu0
    %v180 = vadd.f32 %v136, %v179
    %181 = vmatmul.f32.gmra.mxu0 %v154
    %v182 = vpop.f32.mrf.mxu0
    %v183 = vadd.f32 %v141, %v182
    %184 = vdwg.mxu0
    %v185 = vtanh.pop %v174
    %v186 = vtanh.pop %v177
    %v187 = vtanh.pop %v180
    %v188 = vtanh.pop %v183
    %v189 = vld [vmem:[%s5] sm:$0x1f]
    %v190 = vld [vmem:[%s6] sm:$0x1f]
    %192 = vset.pattern.permute.xlu0 0
    %193 = vperm.xlu0 %192, %v190
    %v194 = vpop.permute.xlu0 %193
    %v197 = vsel %vm143, %v189, 0
    %199 = vmatpush.msra.mxu0 0.0
    %200 = vmatpush.msra.mxu0 0.0
    %201 = vmatpush.msra.mxu0 0.0
    %202 = vmatpush.msra.mxu0 0.0
    %203 = vmatpush.msra.mxu0 0.0
    %204 = vmatpush.msra.mxu0 0.0
    %205 = vmatpush.msra.mxu0 0.0
    %206 = vmatpush.msra.mxu0 0.0
    %207 = vmatpush.msra.mxu0 0.0
    %208 = vmatpush.msra.mxu0 0.0
    %209 = vmatpush.msra.mxu0 0.0
    %210 = vmatpush.msra.mxu0 0.0
    %211 = vmatpush.msra.mxu0 %v188
    %212 = vmatpush.msra.mxu0 %v187
    %213 = vmatpush.msra.mxu0 %v186
    %214 = vmatpush.msra.mxu0 %v185
    %215 = vmatmul.f32.gmra.mxu0 %v197
    %v216 = vpop.f32.mrf.mxu0
    %v217 = vadd.f32 %v194, %v216
    %218 = vdwg.mxu0
    %v219 = vadd.f32 %v27, 0.5
    %v220 = vperm.slane %v219, 0
    %v221 = vmul.f32 %v217, %v220
    %222 = vst [vmem:[#allocation2] sm:$0x1f] %v221
    // Predicated region
    $region30: #{_pinn_forward_t_impl.1} parent=1 // pred_check
      _
    $region31: #{_pinn_forward_t_impl.1} parent=1 // pred_check_branch
      %224 = sbr.rel (0) target = $region33
    $region32: #{_pinn_forward_t_impl.1} parent=1 // pred_region
      %226 = vsyncadd [#allocation3], 0
      %s228 = sshll.u32 [#allocation2], 4
      %s229 = int_to_ptr.vmem [resolvable:$true] %s228
      %s230 = sshll.u32 %s7, 4
      %s231 = int_to_ptr.hbm [resolvable:$true] %s230
      %233 = dma.vmem_to_hbm [thread:$0]  %s229, 128, %s231, [#allocation3]
    $region33: #{_pinn_forward_t_impl.1} parent=1 // pred_fallthru
      _
    // Predicated region
    $region34: #{_pinn_forward_t_impl.1} parent=1 // pred_check
      _
    $region35: #{_pinn_forward_t_impl.1} parent=1 // pred_check_branch
      %235 = sbr.rel (0) target = $region37
    $region36: #{_pinn_forward_t_impl.1} parent=1 // pred_region
      %237 = dma.done [#allocation3], 128
    $region37: #{_pinn_forward_t_impl.1} parent=1 // pred_fallthru
      _
    %238 = vsyncpa [#allocation3], 1

</llo_original>
